<compile_context>
chip_gen: v6e
topology: v6e:2x2x1
jax: 0.10.0
libtpu: 0.0.40
codegen_flags: <defaults>
</compile_context>

<pallas_src>
import functools

import jax
import jax.numpy as jnp
from jax.experimental import pallas as pl
from jax.experimental.pallas import tpu as pltpu


def _residual_layer_kernel(x_ref, wfg_ref, bfg_ref, wres_ref, bres_ref,
                           wskip_ref, bskip_ref, skip_ref, res_ref,
                           *, nb, C, T, dilation, compute_dtype):
    """One grid step = `nb` batch elements folded into the lane axis.

    x_ref    : (nb, C, T)    unpadded input block (VMEM)
    wfg_ref  : (3, 2C, C)    per-tap stacked [filter; gate] weights (BN scale folded)
    bfg_ref  : (2C, 1)       stacked folded BN biases (f32)
    wres_ref : (C, C)        resconv1_1 weight        bres_ref : (C, 1) its bias
    wskip_ref: (C, C)        skipconv1_1 weight       bskip_ref: (C, 1) its bias
    skip_ref : (nb, C, T)    output (skip)
    res_ref  : (nb, C, T)    output (residual)
    """
    L = nb * T

    # Fold the nb batch elements into the lane axis: nb aligned (C, T) slabs -> (C, L).
    xl = jnp.concatenate([x_ref[n] for n in range(nb)], axis=-1)      # (C, L)
    xl_f32 = xl.astype(jnp.float32)
    xl_c = xl.astype(compute_dtype)

    # Position within each length-T segment, for causal masking of rolled taps.
    pos = jax.lax.broadcasted_iota(jnp.int32, (C, L), 1)
    t_in_seg = pos % T                                                # (C, L) int32

    # Dilated causal convs (filter + gate) as 3 accumulating MXU matmuls:
    #   z = sum_k  W_k @ x[:, t - (2-k)*dilation]      (zero for t - s < 0)
    z = jnp.zeros((2 * C, L), dtype=jnp.float32)
    for k in range(3):
        s = (2 - k) * dilation
        if s >= T:
            continue                      # tap entirely outside the segment -> zero
        if s == 0:
            tap = xl_c
        else:
            rolled = pltpu.roll(xl_c, s, 1)                          # XLU lane roll
            tap = jnp.where(t_in_seg >= s, rolled, 0.0)              # causal mask
        z = z + jnp.dot(wfg_ref[k], tap, preferred_element_type=jnp.float32)
    z = z + bfg_ref[...]                                             # (2C, L) f32

    filt = jnp.tanh(z[:C])
    gate = 0.5 * jnp.tanh(0.5 * z[C:]) + 0.5                         # sigmoid, 1 EUP op
    act = filt * gate                                                # (C, L) f32

    fx = jnp.dot(wres_ref[...], act.astype(compute_dtype),
                 preferred_element_type=jnp.float32) + bres_ref[...]  # (C, L)
    skip = jnp.dot(wskip_ref[...], fx.astype(compute_dtype),
                   preferred_element_type=jnp.float32) + bskip_ref[...]
    res = fx + xl_f32

    # Store back per batch element (static, lane-aligned slices of width T).
    for n in range(nb):
        lo, hi = n * T, (n + 1) * T
        skip_ref[n] = skip[:, lo:hi].astype(skip_ref.dtype)
        res_ref[n] = res[:, lo:hi].astype(res_ref.dtype)


@functools.partial(
    jax.jit,
    static_argnames=("dilation", "eps", "batch_block", "compute_dtype"))
def residual_layer_forward(
        x,                                          # (N, C, T)
        w_filter, gamma_f, beta_f, mean_f, var_f,   # CausalConv1d + BN (filter)
        w_gate, gamma_g, beta_g, mean_g, var_g,     # CausalConv1d + BN (gate)
        w_res, b_res,                               # resconv1_1  (C, C, 1), (C,)
        w_skip, b_skip,                             # skipconv1_1 (S, S, 1), (S,)
        *, dilation, eps=1e-5, batch_block=None, compute_dtype=jnp.float32):
    N, C, T = x.shape
    assert w_filter.shape == (C, C, 3) and w_gate.shape == (C, C, 3)
    assert w_res.shape == (C, C, 1)
    assert w_skip.shape[0] == C, "forward requires skip_size == residual_size"

    # Batch elements folded into lanes per grid step.  Default keeps >= 2 grid steps
    # (so v7x's two TensorCores both work) while amortizing per-step overhead.
    if batch_block is None:
        batch_block = 1
        for cand in (8, 4, 2):
            if N % cand == 0 and N // cand >= 2:
                batch_block = cand
                break
    assert N % batch_block == 0
    G = N // batch_block

    # --- plain-JAX glue on the (tiny) weights: BN folding + per-tap packing ------
    scale_f = gamma_f / jnp.sqrt(var_f + eps)
    scale_g = gamma_g / jnp.sqrt(var_g + eps)
    wf_fold = w_filter * scale_f[:, None, None]     # fold BN scale into conv weight
    wg_fold = w_gate * scale_g[:, None, None]
    bf = beta_f - mean_f * scale_f
    bg = beta_g - mean_g * scale_g

    # (2C, C, 3) -> (3, 2C, C): per-tap stacked [filter; gate] weight blocks.
    wfg = jnp.transpose(jnp.concatenate([wf_fold, wg_fold], axis=0),
                        (2, 0, 1)).astype(compute_dtype)              # (3, 2C, C)
    bfg = jnp.concatenate([bf, bg], axis=0).reshape(2 * C, 1)         # (2C, 1) f32

    wres2 = w_res[:, :, 0].astype(compute_dtype)
    wskip2 = w_skip[:, :, 0].astype(compute_dtype)
    bres2 = b_res.reshape(C, 1)
    bskip2 = b_skip.reshape(C, 1)

    kernel = functools.partial(_residual_layer_kernel, nb=batch_block, C=C, T=T,
                               dilation=dilation, compute_dtype=compute_dtype)

    skip, residual = pl.pallas_call(
        kernel,
        out_shape=(jax.ShapeDtypeStruct((N, C, T), x.dtype),
                   jax.ShapeDtypeStruct((N, C, T), x.dtype)),
        grid=(G,),
        in_specs=[
            pl.BlockSpec((batch_block, C, T), lambda g: (g, 0, 0)),
            pl.BlockSpec((3, 2 * C, C), lambda g: (0, 0, 0)),
            pl.BlockSpec((2 * C, 1), lambda g: (0, 0)),
            pl.BlockSpec((C, C), lambda g: (0, 0)),
            pl.BlockSpec((C, 1), lambda g: (0, 0)),
            pl.BlockSpec((C, C), lambda g: (0, 0)),
            pl.BlockSpec((C, 1), lambda g: (0, 0)),
        ],
        out_specs=(
            pl.BlockSpec((batch_block, C, T), lambda g: (g, 0, 0)),
            pl.BlockSpec((batch_block, C, T), lambda g: (g, 0, 0)),
        ),
        compiler_params=pltpu.CompilerParams(
            dimension_semantics=("parallel",)),
    )(x, wfg, bfg, wres2, bres2, wskip2, bskip2)

    return skip, residual


def _reference_forward(x, w_filter, gamma_f, beta_f, mean_f, var_f,
                       w_gate, gamma_g, beta_g, mean_g, var_g,
                       w_res, b_res, w_skip, b_skip, *, dilation, eps=1e-5):
    """Pure-JAX reference mirroring the PyTorch forward (eval-mode BN)."""
    pad = 2 * dilation
    dn = ("NCH", "OIH", "NCH")

    def causal_conv(v, w):
        y = jax.lax.conv_general_dilated(
            v, w, window_strides=(1,), padding=[(pad, pad)],
            rhs_dilation=(dilation,), dimension_numbers=dn,
            precision=jax.lax.Precision.HIGHEST)
        return y[..., :-pad]

    def bn(y, gamma, beta, mean, var):
        scale = gamma / jnp.sqrt(var + eps)
        return y * scale[None, :, None] + (beta - mean * scale)[None, :, None]

    f = bn(causal_conv(x, w_filter), gamma_f, beta_f, mean_f, var_f)
    g = bn(causal_conv(x, w_gate), gamma_g, beta_g, mean_g, var_g)
    act = jnp.tanh(f) * jax.nn.sigmoid(g)

    fx = jax.lax.conv_general_dilated(
        act, w_res, (1,), [(0, 0)], dimension_numbers=dn,
        precision=jax.lax.Precision.HIGHEST) + b_res[None, :, None]
    skip = jax.lax.conv_general_dilated(
        fx, w_skip, (1,), [(0, 0)], dimension_numbers=dn,
        precision=jax.lax.Precision.HIGHEST) + b_skip[None, :, None]
    residual = fx + x
    return skip, residual


if __name__ == "__main__":
    # ResidualLayer(residual_size=8, skip_size=8, dilation=2); x: (N=4, C=8, T=128)
    # N=4 -> batch_block=2, grid=(2,): exercises lane-folding AND keeps 2 parallel steps.
    N, C, T = 4, 8, 128
    dilation = 2

    key = jax.random.PRNGKey(0)
    ks = jax.random.split(key, 15)

    x = jax.random.normal(ks[0], (N, C, T), dtype=jnp.float32)

    w_filter = jax.random.normal(ks[1], (C, C, 3), dtype=jnp.float32) * 0.2
    w_gate = jax.random.normal(ks[2], (C, C, 3), dtype=jnp.float32) * 0.2
    gamma_f = 1.0 + 0.1 * jax.random.normal(ks[3], (C,), dtype=jnp.float32)
    beta_f = 0.1 * jax.random.normal(ks[4], (C,), dtype=jnp.float32)
    mean_f = 0.1 * jax.random.normal(ks[5], (C,), dtype=jnp.float32)
    var_f = jnp.abs(jax.random.normal(ks[6], (C,), dtype=jnp.float32)) + 0.5
    gamma_g = 1.0 + 0.1 * jax.random.normal(ks[7], (C,), dtype=jnp.float32)
    beta_g = 0.1 * jax.random.normal(ks[8], (C,), dtype=jnp.float32)
    mean_g = 0.1 * jax.random.normal(ks[9], (C,), dtype=jnp.float32)
    var_g = jnp.abs(jax.random.normal(ks[10], (C,), dtype=jnp.float32)) + 0.5
    w_res = jax.random.normal(ks[11], (C, C, 1), dtype=jnp.float32) * 0.2
    b_res = 0.1 * jax.random.normal(ks[12], (C,), dtype=jnp.float32)
    w_skip = jax.random.normal(ks[13], (C, C, 1), dtype=jnp.float32) * 0.2
    b_skip = 0.1 * jax.random.normal(ks[14], (C,), dtype=jnp.float32)

    skip, residual = residual_layer_forward(
        x, w_filter, gamma_f, beta_f, mean_f, var_f,
        w_gate, gamma_g, beta_g, mean_g, var_g,
        w_res, b_res, w_skip, b_skip, dilation=dilation)
    skip = jax.block_until_ready(skip)
    residual = jax.block_until_ready(residual)

    skip_ref, residual_ref = _reference_forward(
        x, w_filter, gamma_f, beta_f, mean_f, var_f,
        w_gate, gamma_g, beta_g, mean_g, var_g,
        w_res, b_res, w_skip, b_skip, dilation=dilation)

    assert skip.shape == (N, C, T) and residual.shape == (N, C, T)
    assert jnp.allclose(skip, skip_ref, atol=2e-4, rtol=2e-4), (
        f"skip max abs err {jnp.max(jnp.abs(skip - skip_ref))}")
    assert jnp.allclose(residual, residual_ref, atol=2e-4, rtol=2e-4), (
        f"residual max abs err {jnp.max(jnp.abs(residual - residual_ref))}")

    print("KERNEL_OK")
</pallas_src>

<mosaic_0001>
module attributes {stable_mosaic.version = 11 : i64} {
  func.func @_residual_layer_kernel(%arg0: i32, %arg1: memref<2x8x128xf32, #tpu.memory_space<vmem>>, %arg2: memref<3x16x8xf32, #tpu.memory_space<vmem>>, %arg3: memref<16x1xf32, #tpu.memory_space<vmem>>, %arg4: memref<8x8xf32, #tpu.memory_space<vmem>>, %arg5: memref<8x1xf32, #tpu.memory_space<vmem>>, %arg6: memref<8x8xf32, #tpu.memory_space<vmem>>, %arg7: memref<8x1xf32, #tpu.memory_space<vmem>>, %arg8: memref<2x8x128xf32, #tpu.memory_space<vmem>>, %arg9: memref<2x8x128xf32, #tpu.memory_space<vmem>>) attributes {dimension_semantics = [#tpu.dimension_semantics<parallel>], iteration_bounds = array<i64: 2>, scalar_prefetch = 0 : i64, scratch_operands = 0 : i64, tpu.core_type = #tpu.core_type<tc>, window_params = [{transform_indices = @transform_0, window_bounds = array<i64: 2, 8, 128>}, {pipeline_mode = #tpu.pipeline_mode<synchronous>, transform_indices = @transform_1, window_bounds = array<i64: 3, 16, 8>}, {pipeline_mode = #tpu.pipeline_mode<synchronous>, transform_indices = @transform_2, window_bounds = array<i64: 16, 1>}, {pipeline_mode = #tpu.pipeline_mode<synchronous>, transform_indices = @transform_3, window_bounds = array<i64: 8, 8>}, {pipeline_mode = #tpu.pipeline_mode<synchronous>, transform_indices = @transform_4, window_bounds = array<i64: 8, 1>}, {pipeline_mode = #tpu.pipeline_mode<synchronous>, transform_indices = @transform_5, window_bounds = array<i64: 8, 8>}, {pipeline_mode = #tpu.pipeline_mode<synchronous>, transform_indices = @transform_6, window_bounds = array<i64: 8, 1>}, {transform_indices = @transform_7, window_bounds = array<i64: 2, 8, 128>}, {transform_indices = @transform_8, window_bounds = array<i64: 2, 8, 128>}]} {
    %c0 = arith.constant 0 : index
    %c0_0 = arith.constant 0 : index
    %c0_1 = arith.constant 0 : index
    %0 = vector.load %arg1[%c0, %c0_0, %c0_1] : memref<2x8x128xf32, #tpu.memory_space<vmem>>, vector<1x8x128xf32>
    %1 = vector.shape_cast %0 : vector<1x8x128xf32> to vector<8x128xf32>
    %c1 = arith.constant 1 : index
    %c0_2 = arith.constant 0 : index
    %c0_3 = arith.constant 0 : index
    %2 = vector.load %arg1[%c1, %c0_2, %c0_3] : memref<2x8x128xf32, #tpu.memory_space<vmem>>, vector<1x8x128xf32>
    %3 = vector.shape_cast %2 : vector<1x8x128xf32> to vector<8x128xf32>
    %4 = tpu.concatenate %1, %3 in 1 : vector<8x128xf32>, vector<8x128xf32> -> vector<8x256xf32>
    %5 = tpu.iota {dimensions = array<i32: 1>} : vector<8x256xi32>
    %c128_i32 = arith.constant 128 : i32
    %c0_i32 = arith.constant 0 : i32
    %6 = arith.cmpi eq, %c128_i32, %c0_i32 : i32
    %c1_i32 = arith.constant 1 : i32
    %7 = arith.select %6, %c1_i32, %c128_i32 : i32
    %8 = vector.broadcast %7 : i32 to vector<8x256xi32>
    %9 = arith.remsi %5, %8 : vector<8x256xi32>
    %c0_i32_4 = arith.constant 0 : i32
    %10 = vector.broadcast %c0_i32_4 : i32 to vector<8x256xi32>
    %11 = arith.cmpi ne, %9, %10 : vector<8x256xi32>
    %c0_i32_5 = arith.constant 0 : i32
    %12 = vector.broadcast %c0_i32_5 : i32 to vector<8x256xi32>
    %13 = arith.cmpi slt, %9, %12 : vector<8x256xi32>
    %c0_i32_6 = arith.constant 0 : i32
    %14 = arith.cmpi slt, %7, %c0_i32_6 : i32
    %15 = vector.broadcast %14 : i1 to vector<8x256xi1>
    %16 = vector.broadcast %15 : vector<8x256xi1> to vector<8x256xi1>
    %17 = arith.xori %13, %16 : vector<8x256xi1>
    %18 = arith.andi %17, %11 : vector<8x256xi1>
    %19 = vector.broadcast %7 : i32 to vector<8x256xi32>
    %20 = arith.addi %9, %19 : vector<8x256xi32>
    %21 = arith.select %18, %20, %9 : vector<8x256xi1>, vector<8x256xi32>
    %cst = arith.constant 0.000000e+00 : f32
    %22 = vector.broadcast %cst : f32 to vector<16x256xf32>
    %c4_i32 = arith.constant 4 : i32
    %23 = tpu.dynamic_rotate %4 by %c4_i32 dim 1 : vector<8x256xf32>, i32 -> vector<8x256xf32>
    %c4_i32_7 = arith.constant 4 : i32
    %24 = vector.broadcast %c4_i32_7 : i32 to vector<8x256xi32>
    %25 = arith.cmpi sge, %21, %24 : vector<8x256xi32>
    %cst_8 = arith.constant 0.000000e+00 : f32
    %26 = vector.broadcast %cst_8 : f32 to vector<8x256xf32>
    %27 = arith.select %25, %23, %26 : vector<8x256xi1>, vector<8x256xf32>
    %c0_9 = arith.constant 0 : index
    %c0_10 = arith.constant 0 : index
    %c0_11 = arith.constant 0 : index
    %28 = vector.load %arg2[%c0_9, %c0_10, %c0_11] : memref<3x16x8xf32, #tpu.memory_space<vmem>>, vector<1x16x8xf32>
    %29 = vector.shape_cast %28 : vector<1x16x8xf32> to vector<16x8xf32>
    %cst_12 = arith.constant dense<0.000000e+00> : vector<16x256xf32>
    %30 = tpu.matmul %29, %27, %cst_12 {dimension_numbers = #tpu.dot_dimension_numbers<[1], [0], [0], [1], [0, 0, 1, 1], [], []>} : vector<16x8xf32>, vector<8x256xf32>, vector<16x256xf32> -> vector<16x256xf32>
    %31 = arith.addf %22, %30 : vector<16x256xf32>
    %c2_i32 = arith.constant 2 : i32
    %32 = tpu.dynamic_rotate %4 by %c2_i32 dim 1 : vector<8x256xf32>, i32 -> vector<8x256xf32>
    %c2_i32_13 = arith.constant 2 : i32
    %33 = vector.broadcast %c2_i32_13 : i32 to vector<8x256xi32>
    %34 = arith.cmpi sge, %21, %33 : vector<8x256xi32>
    %cst_14 = arith.constant 0.000000e+00 : f32
    %35 = vector.broadcast %cst_14 : f32 to vector<8x256xf32>
    %36 = arith.select %34, %32, %35 : vector<8x256xi1>, vector<8x256xf32>
    %c1_15 = arith.constant 1 : index
    %c0_16 = arith.constant 0 : index
    %c0_17 = arith.constant 0 : index
    %37 = vector.load %arg2[%c1_15, %c0_16, %c0_17] : memref<3x16x8xf32, #tpu.memory_space<vmem>>, vector<1x16x8xf32>
    %38 = vector.shape_cast %37 : vector<1x16x8xf32> to vector<16x8xf32>
    %cst_18 = arith.constant dense<0.000000e+00> : vector<16x256xf32>
    %39 = tpu.matmul %38, %36, %cst_18 {dimension_numbers = #tpu.dot_dimension_numbers<[1], [0], [0], [1], [0, 0, 1, 1], [], []>} : vector<16x8xf32>, vector<8x256xf32>, vector<16x256xf32> -> vector<16x256xf32>
    %40 = arith.addf %31, %39 : vector<16x256xf32>
    %c2 = arith.constant 2 : index
    %c0_19 = arith.constant 0 : index
    %c0_20 = arith.constant 0 : index
    %41 = vector.load %arg2[%c2, %c0_19, %c0_20] : memref<3x16x8xf32, #tpu.memory_space<vmem>>, vector<1x16x8xf32>
    %42 = vector.shape_cast %41 : vector<1x16x8xf32> to vector<16x8xf32>
    %cst_21 = arith.constant dense<0.000000e+00> : vector<16x256xf32>
    %43 = tpu.matmul %42, %4, %cst_21 {dimension_numbers = #tpu.dot_dimension_numbers<[1], [0], [0], [1], [0, 0, 1, 1], [], []>} : vector<16x8xf32>, vector<8x256xf32>, vector<16x256xf32> -> vector<16x256xf32>
    %44 = arith.addf %40, %43 : vector<16x256xf32>
    %c0_22 = arith.constant 0 : index
    %c0_23 = arith.constant 0 : index
    %45 = vector.load %arg3[%c0_22, %c0_23] : memref<16x1xf32, #tpu.memory_space<vmem>>, vector<16x1xf32>
    %46 = vector.broadcast %45 : vector<16x1xf32> to vector<16x256xf32>
    %47 = arith.addf %44, %46 : vector<16x256xf32>
    %48 = vector.extract_strided_slice %47 {offsets = [0, 0], sizes = [8, 256], strides = [1, 1]} : vector<16x256xf32> to vector<8x256xf32>
    %49 = math.tanh %48 : vector<8x256xf32>
    %50 = vector.extract_strided_slice %47 {offsets = [8, 0], sizes = [8, 256], strides = [1, 1]} : vector<16x256xf32> to vector<8x256xf32>
    %cst_24 = arith.constant 5.000000e-01 : f32
    %51 = vector.broadcast %cst_24 : f32 to vector<8x256xf32>
    %52 = arith.mulf %51, %50 : vector<8x256xf32>
    %53 = math.tanh %52 : vector<8x256xf32>
    %cst_25 = arith.constant 5.000000e-01 : f32
    %54 = vector.broadcast %cst_25 : f32 to vector<8x256xf32>
    %55 = arith.mulf %54, %53 : vector<8x256xf32>
    %cst_26 = arith.constant 5.000000e-01 : f32
    %56 = vector.broadcast %cst_26 : f32 to vector<8x256xf32>
    %57 = arith.addf %55, %56 : vector<8x256xf32>
    %58 = arith.mulf %49, %57 : vector<8x256xf32>
    %c0_27 = arith.constant 0 : index
    %c0_28 = arith.constant 0 : index
    %59 = vector.load %arg4[%c0_27, %c0_28] : memref<8x8xf32, #tpu.memory_space<vmem>>, vector<8x8xf32>
    %cst_29 = arith.constant dense<0.000000e+00> : vector<8x256xf32>
    %60 = tpu.matmul %59, %58, %cst_29 {dimension_numbers = #tpu.dot_dimension_numbers<[1], [0], [0], [1], [0, 0, 1, 1], [], []>} : vector<8x8xf32>, vector<8x256xf32>, vector<8x256xf32> -> vector<8x256xf32>
    %c0_30 = arith.constant 0 : index
    %c0_31 = arith.constant 0 : index
    %61 = vector.load %arg5[%c0_30, %c0_31] : memref<8x1xf32, #tpu.memory_space<vmem>>, vector<8x1xf32>
    %62 = vector.broadcast %61 : vector<8x1xf32> to vector<8x256xf32>
    %63 = arith.addf %60, %62 : vector<8x256xf32>
    %c0_32 = arith.constant 0 : index
    %c0_33 = arith.constant 0 : index
    %64 = vector.load %arg6[%c0_32, %c0_33] : memref<8x8xf32, #tpu.memory_space<vmem>>, vector<8x8xf32>
    %cst_34 = arith.constant dense<0.000000e+00> : vector<8x256xf32>
    %65 = tpu.matmul %64, %63, %cst_34 {dimension_numbers = #tpu.dot_dimension_numbers<[1], [0], [0], [1], [0, 0, 1, 1], [], []>} : vector<8x8xf32>, vector<8x256xf32>, vector<8x256xf32> -> vector<8x256xf32>
    %c0_35 = arith.constant 0 : index
    %c0_36 = arith.constant 0 : index
    %66 = vector.load %arg7[%c0_35, %c0_36] : memref<8x1xf32, #tpu.memory_space<vmem>>, vector<8x1xf32>
    %67 = vector.broadcast %66 : vector<8x1xf32> to vector<8x256xf32>
    %68 = arith.addf %65, %67 : vector<8x256xf32>
    %69 = arith.addf %63, %4 : vector<8x256xf32>
    %70 = vector.extract_strided_slice %68 {offsets = [0, 0], sizes = [8, 128], strides = [1, 1]} : vector<8x256xf32> to vector<8x128xf32>
    %c0_37 = arith.constant 0 : index
    %c0_38 = arith.constant 0 : index
    %c0_39 = arith.constant 0 : index
    %71 = vector.load %arg8[%c0_37, %c0_38, %c0_39] : memref<2x8x128xf32, #tpu.memory_space<vmem>>, vector<1x8x128xf32>
    %72 = vector.shape_cast %71 : vector<1x8x128xf32> to vector<8x128xf32>
    %73 = vector.shape_cast %70 : vector<8x128xf32> to vector<1x8x128xf32>
    tpu.vector_store %arg8[%c0_37, %c0_38, %c0_39], %73 {strides = array<i32>} : memref<2x8x128xf32, #tpu.memory_space<vmem>>, vector<1x8x128xf32>,
    %74 = vector.extract_strided_slice %69 {offsets = [0, 0], sizes = [8, 128], strides = [1, 1]} : vector<8x256xf32> to vector<8x128xf32>
    %c0_40 = arith.constant 0 : index
    %c0_41 = arith.constant 0 : index
    %c0_42 = arith.constant 0 : index
    %75 = vector.load %arg9[%c0_40, %c0_41, %c0_42] : memref<2x8x128xf32, #tpu.memory_space<vmem>>, vector<1x8x128xf32>
    %76 = vector.shape_cast %75 : vector<1x8x128xf32> to vector<8x128xf32>
    %77 = vector.shape_cast %74 : vector<8x128xf32> to vector<1x8x128xf32>
    tpu.vector_store %arg9[%c0_40, %c0_41, %c0_42], %77 {strides = array<i32>} : memref<2x8x128xf32, #tpu.memory_space<vmem>>, vector<1x8x128xf32>,
    %78 = vector.extract_strided_slice %68 {offsets = [0, 128], sizes = [8, 128], strides = [1, 1]} : vector<8x256xf32> to vector<8x128xf32>
    %c1_43 = arith.constant 1 : index
    %c0_44 = arith.constant 0 : index
    %c0_45 = arith.constant 0 : index
    %79 = vector.load %arg8[%c1_43, %c0_44, %c0_45] : memref<2x8x128xf32, #tpu.memory_space<vmem>>, vector<1x8x128xf32>
    %80 = vector.shape_cast %79 : vector<1x8x128xf32> to vector<8x128xf32>
    %81 = vector.shape_cast %78 : vector<8x128xf32> to vector<1x8x128xf32>
    tpu.vector_store %arg8[%c1_43, %c0_44, %c0_45], %81 {strides = array<i32>} : memref<2x8x128xf32, #tpu.memory_space<vmem>>, vector<1x8x128xf32>,
    %82 = vector.extract_strided_slice %69 {offsets = [0, 128], sizes = [8, 128], strides = [1, 1]} : vector<8x256xf32> to vector<8x128xf32>
    %c1_46 = arith.constant 1 : index
    %c0_47 = arith.constant 0 : index
    %c0_48 = arith.constant 0 : index
    %83 = vector.load %arg9[%c1_46, %c0_47, %c0_48] : memref<2x8x128xf32, #tpu.memory_space<vmem>>, vector<1x8x128xf32>
    %84 = vector.shape_cast %83 : vector<1x8x128xf32> to vector<8x128xf32>
    %85 = vector.shape_cast %82 : vector<8x128xf32> to vector<1x8x128xf32>
    tpu.vector_store %arg9[%c1_46, %c0_47, %c0_48], %85 {strides = array<i32>} : memref<2x8x128xf32, #tpu.memory_space<vmem>>, vector<1x8x128xf32>,
    return
  }
  func.func @transform_0(%arg0: i32) -> (i32, i32, i32) {
    %c0_i32 = arith.constant 0 : i32
    %c0_i32_0 = arith.constant 0 : i32
    %c0_i32_1 = arith.constant 0 : i32
    return %arg0, %c0_i32, %c0_i32_0 : i32, i32, i32
  }
  func.func @transform_1(%arg0: i32) -> (i32, i32, i32) {
    %c0_i32 = arith.constant 0 : i32
    %c0_i32_0 = arith.constant 0 : i32
    %c0_i32_1 = arith.constant 0 : i32
    %c0_i32_2 = arith.constant 0 : i32
    return %c0_i32, %c0_i32_0, %c0_i32_1 : i32, i32, i32
  }
  func.func @transform_2(%arg0: i32) -> (i32, i32) {
    %c0_i32 = arith.constant 0 : i32
    %c0_i32_0 = arith.constant 0 : i32
    %c0_i32_1 = arith.constant 0 : i32
    return %c0_i32, %c0_i32_0 : i32, i32
  }
  func.func @transform_3(%arg0: i32) -> (i32, i32) {
    %c0_i32 = arith.constant 0 : i32
    %c0_i32_0 = arith.constant 0 : i32
    %c0_i32_1 = arith.constant 0 : i32
    return %c0_i32, %c0_i32_0 : i32, i32
  }
  func.func @transform_4(%arg0: i32) -> (i32, i32) {
    %c0_i32 = arith.constant 0 : i32
    %c0_i32_0 = arith.constant 0 : i32
    %c0_i32_1 = arith.constant 0 : i32
    return %c0_i32, %c0_i32_0 : i32, i32
  }
  func.func @transform_5(%arg0: i32) -> (i32, i32) {
    %c0_i32 = arith.constant 0 : i32
    %c0_i32_0 = arith.constant 0 : i32
    %c0_i32_1 = arith.constant 0 : i32
    return %c0_i32, %c0_i32_0 : i32, i32
  }
  func.func @transform_6(%arg0: i32) -> (i32, i32) {
    %c0_i32 = arith.constant 0 : i32
    %c0_i32_0 = arith.constant 0 : i32
    %c0_i32_1 = arith.constant 0 : i32
    return %c0_i32, %c0_i32_0 : i32, i32
  }
  func.func @transform_7(%arg0: i32) -> (i32, i32, i32) {
    %c0_i32 = arith.constant 0 : i32
    %c0_i32_0 = arith.constant 0 : i32
    %c0_i32_1 = arith.constant 0 : i32
    return %arg0, %c0_i32, %c0_i32_0 : i32, i32, i32
  }
  func.func @transform_8(%arg0: i32) -> (i32, i32, i32) {
    %c0_i32 = arith.constant 0 : i32
    %c0_i32_0 = arith.constant 0 : i32
    %c0_i32_1 = arith.constant 0 : i32
    return %arg0, %c0_i32, %c0_i32_0 : i32, i32, i32
  }
}

</mosaic_0001>

<llo_original>
// kernel: residual_layer_forward.1
$region0: #{residual_layer_forward.1}
  #allocation0 [shape = 'u32[]', space=smem, size = 0x4, offset = 0x4, fixed_abs, tag = 'smem constant byte address 0x4 - core index']
  #allocation1 [shape = 'u32[144,128]{1,0:T(1,128)}', space=vmem, size = 0x12000, scoped, tag = 'internal scratch']
  %s0 = inlined_call_operand.vmem [shape: f32[4,8,128], index: 0, kind: input, shape index: {}]
  %s1 = inlined_call_operand.vmem [shape: f32[3,16,8], index: 1, kind: input, shape index: {}]
  %s2 = inlined_call_operand.vmem [shape: f32[16,1], index: 2, kind: input, shape index: {}]
  %s3 = inlined_call_operand.vmem [shape: f32[8,8], index: 3, kind: input, shape index: {}]
  %s4 = inlined_call_operand.vmem [shape: f32[8,1], index: 4, kind: input, shape index: {}]
  %s5 = inlined_call_operand.vmem [shape: f32[8,8], index: 5, kind: input, shape index: {}]
  %s6 = inlined_call_operand.vmem [shape: f32[8,1], index: 6, kind: input, shape index: {}]
  %s7 = inlined_call_operand.hbm [shape: f32[4,8,128], index: 7, kind: output, shape index: {0}]
  %s8 = inlined_call_operand.hbm [shape: f32[4,8,128], index: 8, kind: output, shape index: {1}]
  %9 = xla_tuple %s7, %s8
  %s10 = sld [smem:[#allocation0]]
  $region69: #{residual_layer_forward.1} parent=0
    _
  %s12 = ssub.s32 1, %s10
  %s13 = scalar_select 0, %s12, %s10
  $region1: #{residual_layer_forward.1} parent=0
    #allocation2 [shape = 'u8[16384]{0}', space=vmem, size = 0x4000, scoped, tag = 'output window, operand 0']
    #allocation3 [shape = 's32[2]{0}', space=sflag, size = 0x8, scoped, tag = 'scoped memory for residual_layer_forward.1']
    #allocation4 [shape = 'u8[16384]{0}', space=vmem, size = 0x4000, scoped, tag = 'output window, operand 1']
    #allocation5 [shape = 's32[2]{0}', space=sflag, size = 0x8, scoped, tag = 'scoped memory for residual_layer_forward.1']
    %14 = vsyncpa [#allocation3], 0
    %s15 = scalar_lea.sflag [#allocation3], 1
    %16 = vsyncpa %s15, 0
    %17 = vsyncpa [#allocation5], 0
    %s18 = scalar_lea.sflag [#allocation5], 1
    %19 = vsyncpa %s18, 0
    loop: start=0, step=1, limit=4
    $region2: #{residual_layer_forward.1} parent=1 // loop_pre_header
      _
    $region3: #{residual_layer_forward.1} parent=1 // loop_header
      %s21 = sphi 0, %s25
      %p22 = scmp.ge.s32.totalorder %s21, 4
      %s31 = sphi 0, %s33
      %s34 = sphi 0, %s31
      %s35 = sphi 0, %s34
      %s51 = sphi 0, %s35
      %s55 = sphi 0, %s55
      %s57 = sphi 0, %s55
      %s58 = sphi 0, %s57
      %s72 = sphi 0, %s58
      %s76 = sphi 0, %s76
      %s78 = sphi 0, %s76
      %s79 = sphi 0, %s78
      %s93 = sphi 0, %s79
      %s97 = sphi 0, %s97
      %s99 = sphi 0, %s97
      %s100 = sphi 0, %s99
      %s114 = sphi 0, %s100
      %s118 = sphi 0, %s118
      %s120 = sphi 0, %s118
      %s121 = sphi 0, %s120
      %s135 = sphi 0, %s121
      %s139 = sphi 0, %s139
      %s141 = sphi 0, %s139
      %s142 = sphi 0, %s141
      %s156 = sphi 0, %s142
      %s160 = sphi 0, %s160
      %s162 = sphi 0, %s160
      %s163 = sphi 0, %s162
      %s177 = sphi 0, %s163
      %s183 = sphi 0, %s185
      %s186 = sphi 0, %s183
      %s187 = sphi 0, %s186
      %s203 = sphi 0, %s187
      %s209 = sphi 0, %s211
      %s212 = sphi 0, %s209
      %s213 = sphi 0, %s212
      %s229 = sphi 0, %s213
    $region4: #{residual_layer_forward.1} parent=1 // loop_header_branch
      %24 = sbr.rel (%p22) target = $region8
    $region5: #{residual_layer_forward.1} parent=1 // loop_body
      %s26 = ssub.s32 %s21, 1
      %s27 = ssub.s32 %s21, 2
      %s28 = sadd.s32 %s21, 1
      %s29 = ssub.s32 %s21, %s28
      %p30 = scmp.eq.s32.totalorder %s29, 0
      %s32 = sadd.s32 %s31, 1
      %s33 = scalar_select %p30, %s31, %s32
      %p36 = pneg %p30
      %p37 = scmp.eq.s32.totalorder %s21, 1
      %p38 = por %p36, %p37
      %p39 = scmp.ne.s32.totalorder %s31, %s34
      %p40 = scmp.eq.s32.totalorder %s21, 0
      %p41 = por %p39, %p40
      %p42 = scmp.ne.s32.totalorder %s31, %s34
      %p43 = scmp.eq.s32.totalorder %s26, 1
      %p44 = por %p42, %p43
      %p45 = scmp.ne.s32.totalorder %s34, %s35
      %p46 = scmp.eq.s32.totalorder %s26, 0
      %p47 = por %p45, %p46
      %p48 = scmp.ne.s32.totalorder %s34, %s35
      %p49 = scmp.eq.s32.totalorder %s27, 1
      %p50 = por %p48, %p49
      %p52 = scmp.ne.s32.totalorder %s35, %s51
      %p53 = scmp.eq.s32.totalorder %s27, 0
      %p54 = por %p52, %p53
      %s56 = sadd.s32 %s55, 1
      %p59 = scmp.eq.s32.totalorder %s21, 1
      %p60 = scmp.ne.s32.totalorder %s55, %s57
      %p61 = scmp.eq.s32.totalorder %s21, 0
      %p62 = por %p60, %p61
      %p63 = scmp.ne.s32.totalorder %s55, %s57
      %p64 = scmp.eq.s32.totalorder %s26, 1
      %p65 = por %p63, %p64
      %p66 = scmp.ne.s32.totalorder %s57, %s58
      %p67 = scmp.eq.s32.totalorder %s26, 0
      %p68 = por %p66, %p67
      %p69 = scmp.ne.s32.totalorder %s57, %s58
      %p70 = scmp.eq.s32.totalorder %s27, 1
      %p71 = por %p69, %p70
      %p73 = scmp.ne.s32.totalorder %s58, %s72
      %p74 = scmp.eq.s32.totalorder %s27, 0
      %p75 = por %p73, %p74
      %s77 = sadd.s32 %s76, 1
      %p80 = scmp.eq.s32.totalorder %s21, 1
      %p81 = scmp.ne.s32.totalorder %s76, %s78
      %p82 = scmp.eq.s32.totalorder %s21, 0
      %p83 = por %p81, %p82
      %p84 = scmp.ne.s32.totalorder %s76, %s78
      %p85 = scmp.eq.s32.totalorder %s26, 1
      %p86 = por %p84, %p85
      %p87 = scmp.ne.s32.totalorder %s78, %s79
      %p88 = scmp.eq.s32.totalorder %s26, 0
      %p89 = por %p87, %p88
      %p90 = scmp.ne.s32.totalorder %s78, %s79
      %p91 = scmp.eq.s32.totalorder %s27, 1
      %p92 = por %p90, %p91
      %p94 = scmp.ne.s32.totalorder %s79, %s93
      %p95 = scmp.eq.s32.totalorder %s27, 0
      %p96 = por %p94, %p95
      %s98 = sadd.s32 %s97, 1
      %p101 = scmp.eq.s32.totalorder %s21, 1
      %p102 = scmp.ne.s32.totalorder %s97, %s99
      %p103 = scmp.eq.s32.totalorder %s21, 0
      %p104 = por %p102, %p103
      %p105 = scmp.ne.s32.totalorder %s97, %s99
      %p106 = scmp.eq.s32.totalorder %s26, 1
      %p107 = por %p105, %p106
      %p108 = scmp.ne.s32.totalorder %s99, %s100
      %p109 = scmp.eq.s32.totalorder %s26, 0
      %p110 = por %p108, %p109
      %p111 = scmp.ne.s32.totalorder %s99, %s100
      %p112 = scmp.eq.s32.totalorder %s27, 1
      %p113 = por %p111, %p112
      %p115 = scmp.ne.s32.totalorder %s100, %s114
      %p116 = scmp.eq.s32.totalorder %s27, 0
      %p117 = por %p115, %p116
      %s119 = sadd.s32 %s118, 1
      %p122 = scmp.eq.s32.totalorder %s21, 1
      %p123 = scmp.ne.s32.totalorder %s118, %s120
      %p124 = scmp.eq.s32.totalorder %s21, 0
      %p125 = por %p123, %p124
      %p126 = scmp.ne.s32.totalorder %s118, %s120
      %p127 = scmp.eq.s32.totalorder %s26, 1
      %p128 = por %p126, %p127
      %p129 = scmp.ne.s32.totalorder %s120, %s121
      %p130 = scmp.eq.s32.totalorder %s26, 0
      %p131 = por %p129, %p130
      %p132 = scmp.ne.s32.totalorder %s120, %s121
      %p133 = scmp.eq.s32.totalorder %s27, 1
      %p134 = por %p132, %p133
      %p136 = scmp.ne.s32.totalorder %s121, %s135
      %p137 = scmp.eq.s32.totalorder %s27, 0
      %p138 = por %p136, %p137
      %s140 = sadd.s32 %s139, 1
      %p143 = scmp.eq.s32.totalorder %s21, 1
      %p144 = scmp.ne.s32.totalorder %s139, %s141
      %p145 = scmp.eq.s32.totalorder %s21, 0
      %p146 = por %p144, %p145
      %p147 = scmp.ne.s32.totalorder %s139, %s141
      %p148 = scmp.eq.s32.totalorder %s26, 1
      %p149 = por %p147, %p148
      %p150 = scmp.ne.s32.totalorder %s141, %s142
      %p151 = scmp.eq.s32.totalorder %s26, 0
      %p152 = por %p150, %p151
      %p153 = scmp.ne.s32.totalorder %s141, %s142
      %p154 = scmp.eq.s32.totalorder %s27, 1
      %p155 = por %p153, %p154
      %p157 = scmp.ne.s32.totalorder %s142, %s156
      %p158 = scmp.eq.s32.totalorder %s27, 0
      %p159 = por %p157, %p158
      %s161 = sadd.s32 %s160, 1
      %p164 = scmp.eq.s32.totalorder %s21, 1
      %p165 = scmp.ne.s32.totalorder %s160, %s162
      %p166 = scmp.eq.s32.totalorder %s21, 0
      %p167 = por %p165, %p166
      %p168 = scmp.ne.s32.totalorder %s160, %s162
      %p169 = scmp.eq.s32.totalorder %s26, 1
      %p170 = por %p168, %p169
      %p171 = scmp.ne.s32.totalorder %s162, %s163
      %p172 = scmp.eq.s32.totalorder %s26, 0
      %p173 = por %p171, %p172
      %p174 = scmp.ne.s32.totalorder %s162, %s163
      %p175 = scmp.eq.s32.totalorder %s27, 1
      %p176 = por %p174, %p175
      %p178 = scmp.ne.s32.totalorder %s163, %s177
      %p179 = scmp.eq.s32.totalorder %s27, 0
      %p180 = por %p178, %p179
      %s181 = ssub.s32 %s21, %s28
      %p182 = scmp.eq.s32.totalorder %s181, 0
      %s184 = sadd.s32 %s183, 1
      %s185 = scalar_select %p182, %s183, %s184
      %p188 = pneg %p182
      %p189 = scmp.eq.s32.totalorder %s21, 1
      %p190 = por %p188, %p189
      %p191 = scmp.ne.s32.totalorder %s183, %s186
      %p192 = scmp.eq.s32.totalorder %s21, 0
      %p193 = por %p191, %p192
      %p194 = scmp.ne.s32.totalorder %s183, %s186
      %p195 = scmp.eq.s32.totalorder %s26, 1
      %p196 = por %p194, %p195
      %p197 = scmp.ne.s32.totalorder %s186, %s187
      %p198 = scmp.eq.s32.totalorder %s26, 0
      %p199 = por %p197, %p198
      %p200 = scmp.ne.s32.totalorder %s186, %s187
      %p201 = scmp.eq.s32.totalorder %s27, 1
      %p202 = por %p200, %p201
      %p204 = scmp.ne.s32.totalorder %s187, %s203
      %p205 = scmp.eq.s32.totalorder %s27, 0
      %p206 = por %p204, %p205
      %s207 = ssub.s32 %s21, %s28
      %p208 = scmp.eq.s32.totalorder %s207, 0
      %s210 = sadd.s32 %s209, 1
      %s211 = scalar_select %p208, %s209, %s210
      %p214 = pneg %p208
      %p215 = scmp.eq.s32.totalorder %s21, 1
      %p216 = por %p214, %p215
      %p217 = scmp.ne.s32.totalorder %s209, %s212
      %p218 = scmp.eq.s32.totalorder %s21, 0
      %p219 = por %p217, %p218
      %p220 = scmp.ne.s32.totalorder %s209, %s212
      %p221 = scmp.eq.s32.totalorder %s26, 1
      %p222 = por %p220, %p221
      %p223 = scmp.ne.s32.totalorder %s212, %s213
      %p224 = scmp.eq.s32.totalorder %s26, 0
      %p225 = por %p223, %p224
      %p226 = scmp.ne.s32.totalorder %s212, %s213
      %p227 = scmp.eq.s32.totalorder %s27, 1
      %p228 = por %p226, %p227
      %p230 = scmp.ne.s32.totalorder %s213, %s229
      %p231 = scmp.eq.s32.totalorder %s27, 0
      %p232 = por %p230, %p231
      %p233 = scmp.le.s32.totalorder 1, %s21
      %p234 = scmp.lt.s32.totalorder %s21, 3
      %p235 = pnand %p233, %p234
      %p236 = pneg %p235
      // Predicated region
      $region9: #{residual_layer_forward.1} parent=5 // pred_check
        _
      $region10: #{residual_layer_forward.1} parent=5 // pred_check_branch
        %238 = sbr.rel (%p235) target = $region12
      $region11: #{residual_layer_forward.1} parent=5 // pred_region
        %s239 = ssub.s32 %s21, 1
        // Predicated region
        $region13: #{residual_layer_forward.1} parent=11 // pred_check
          %p240 = pneg %p68
        $region14: #{residual_layer_forward.1} parent=11 // pred_check_branch
          %242 = sbr.rel (%p240) target = $region16
        $region15: #{residual_layer_forward.1} parent=11 // pred_region
          _
        $region16: #{residual_layer_forward.1} parent=11 // pred_fallthru
          _
        // Predicated region
        $region17: #{residual_layer_forward.1} parent=11 // pred_check
          %p243 = pneg %p89
        $region18: #{residual_layer_forward.1} parent=11 // pred_check_branch
          %245 = sbr.rel (%p243) target = $region20
        $region19: #{residual_layer_forward.1} parent=11 // pred_region
          _
        $region20: #{residual_layer_forward.1} parent=11 // pred_fallthru
          _
        // Predicated region
        $region21: #{residual_layer_forward.1} parent=11 // pred_check
          %p246 = pneg %p110
        $region22: #{residual_layer_forward.1} parent=11 // pred_check_branch
          %248 = sbr.rel (%p246) target = $region24
        $region23: #{residual_layer_forward.1} parent=11 // pred_region
          _
        $region24: #{residual_layer_forward.1} parent=11 // pred_fallthru
          _
        // Predicated region
        $region25: #{residual_layer_forward.1} parent=11 // pred_check
          %p249 = pneg %p131
        $region26: #{residual_layer_forward.1} parent=11 // pred_check_branch
          %251 = sbr.rel (%p249) target = $region28
        $region27: #{residual_layer_forward.1} parent=11 // pred_region
          _
        $region28: #{residual_layer_forward.1} parent=11 // pred_fallthru
          _
        // Predicated region
        $region29: #{residual_layer_forward.1} parent=11 // pred_check
          %p252 = pneg %p152
        $region30: #{residual_layer_forward.1} parent=11 // pred_check_branch
          %254 = sbr.rel (%p252) target = $region32
        $region31: #{residual_layer_forward.1} parent=11 // pred_region
          _
        $region32: #{residual_layer_forward.1} parent=11 // pred_fallthru
          _
        // Predicated region
        $region33: #{residual_layer_forward.1} parent=11 // pred_check
          %p255 = pneg %p173
        $region34: #{residual_layer_forward.1} parent=11 // pred_check_branch
          %257 = sbr.rel (%p255) target = $region36
        $region35: #{residual_layer_forward.1} parent=11 // pred_region
          _
        $region36: #{residual_layer_forward.1} parent=11 // pred_fallthru
          _
      $region12: #{residual_layer_forward.1} parent=5 // pred_fallthru
        _
      %p258 = scmp.lt.s32.totalorder %s21, 2
      // Predicated region
      $region37: #{residual_layer_forward.1} parent=5 // pred_check
        %p259 = pneg %p258
      $region38: #{residual_layer_forward.1} parent=5 // pred_check_branch
        %261 = sbr.rel (%p259) target = $region40
      $region39: #{residual_layer_forward.1} parent=5 // pred_region
        // Predicated region
        $region41: #{residual_layer_forward.1} parent=39 // pred_check
          %p262 = pneg %p41
        $region42: #{residual_layer_forward.1} parent=39 // pred_check_branch
          %264 = sbr.rel (%p262) target = $region44
        $region43: #{residual_layer_forward.1} parent=39 // pred_region
          %s265 = smul.u32 2, %s21
          %p266 = scmp.lt.s32.totalorder %s265, 3
          %s267 = scalar_select %p266, %s265, 3
          %s268 = smul.addr %s267, 8
          %s269 = scalar_lea.vmem %s0, %s268
          %s270 = smul.u32 2, %s21
        $region44: #{residual_layer_forward.1} parent=39 // pred_fallthru
          _
      $region40: #{residual_layer_forward.1} parent=5 // pred_fallthru
        _
      %p271 = scmp.le.s32.totalorder 1, %s21
      %p272 = scmp.lt.s32.totalorder %s21, 3
      %p273 = pnand %p271, %p272
      %p274 = pneg %p273
      // Predicated region
      $region45: #{residual_layer_forward.1} parent=5 // pred_check
        _
      $region46: #{residual_layer_forward.1} parent=5 // pred_check_branch
        %276 = sbr.rel (%p273) target = $region48
      $region47: #{residual_layer_forward.1} parent=5 // pred_region
        %s277 = ssub.s32 %s21, 1
        %s278 = smul.u32 2, %s26
        %p279 = scmp.lt.s32.totalorder %s278, 3
        %s280 = scalar_select %p279, %s278, 3
        %s281 = smul.addr %s280, 8
        %s282 = scalar_lea.vmem %s0, %s281
        %p283 = pneg %p47
        %p284 = pneg %p44
        %p285 = pneg %p68
        %p286 = pneg %p65
        %p287 = pneg %p89
        %p288 = pneg %p86
        %p289 = pneg %p110
        %p290 = pneg %p107
        %p291 = pneg %p131
        %p292 = pneg %p128
        %p293 = pneg %p152
        %p294 = pneg %p149
        %p295 = pneg %p173
        %p296 = pneg %p170
        %p297 = pneg %p199
        %p298 = pneg %p196
        %s299 = sand.u32 %s186, 1
        %s300 = scalar_lea.sflag [#allocation3], %s299
        %s301 = sand.u32 %s186, 1
        %s302 = smul.addr %s301, 16
        %s303 = scalar_lea.vmem [#allocation2], %s302
        %p304 = pneg %p225
        %p305 = pneg %p222
        %s306 = sand.u32 %s212, 1
        %s307 = scalar_lea.sflag [#allocation5], %s306
        %s308 = sand.u32 %s212, 1
        %s309 = smul.addr %s308, 16
        %s310 = scalar_lea.vmem [#allocation4], %s309
        %s311 = smul.u32 2, %s26
        %p312 = scmp.lt.s32.totalorder %s311, 3
        %s313 = scalar_select %p312, %s311, 3
        %s314 = smul.addr %s313, 8
        %s315 = scalar_lea.vmem %s0, %s314
        %s316 = smul.u32 2, %s26
        %s317 = smul.u32 2, %s26
        %s318 = smul.u32 2, %s26
        %v319 = vld [vmem:[%s315] sm:$0xff]
        %s320 = scalar_lea.vmem %s315, 8
        %v321 = vld [vmem:[%s320] sm:$0xff]
        %v322 = vlaneseq
        %v323 = vand.u32 %v322, 127
        %v324 = vadd.s32 %v323, 128
        %vm325 = vcmp.lt.s32.totalorder %v323, 0
        %v326 = vsub.s32 0, %v323
        %v327 = vsel %vm325, %v326, %v323
        %v328 = vshrl.u32 %v327, 7
        %v329 = vand.u32 %v327, 127
        %v330 = vsub.s32 0, %v329
        %v331 = vsel %vm325, %v330, %v329
        %vm332 = vcmp.lt.s32.totalorder %v324, 0
        %v333 = vsub.s32 0, %v324
        %v334 = vsel %vm332, %v333, %v324
        %v335 = vshrl.u32 %v334, 7
        %v336 = vand.u32 %v334, 127
        %v337 = vsub.s32 0, %v336
        %v338 = vsel %vm332, %v337, %v336
        %vm339 = vcmp.ne.s32.totalorder %v331, 0
        %vm340 = vcmp.ne.s32.totalorder %v338, 0
        %vm341 = vcmp.lt.s32.totalorder %v331, 0
        %vm342 = vcmp.lt.s32.totalorder %v338, 0
        %vm343 = vmand %vm341, %vm339
        %vm344 = vmand %vm342, %vm340
        %v345 = vadd.s32 %v331, 128
        %v346 = vadd.s32 %v338, 128
        %v347 = vsel %vm343, %v345, %v331
        %v348 = vsel %vm344, %v346, %v338
        %349 = vrot.lane.b32.xlu0 %v319, 4
        %v350 = vpop.permute.xlu0 %349
        %351 = vrot.lane.b32.xlu0 %v321, 4
        %v352 = vpop.permute.xlu0 %351
        %vm353 = vcmp.lt.s32.totalorder %v323, 4
        %v354 = vsel %vm353, %v350, %v352
        %v355 = vsel %vm353, %v352, %v350
        %vm356 = vcmp.ge.s32.totalorder %v347, 4
        %vm357 = vcmp.ge.s32.totalorder %v348, 4
        %v358 = vsel %vm356, %v355, 0.0
        %v359 = vsel %vm357, %v354, 0.0
        %v360 = vld [vmem:[%s1] sm:$0xff]
        %v361 = vld [vmem:[%s1 + $0x8] sm:$0xff]
        %362 = vrot.lane.b32.xlu0 %v319, 2
        %v363 = vpop.permute.xlu0 %362
        %364 = vrot.lane.b32.xlu0 %v321, 2
        %v365 = vpop.permute.xlu0 %364
        %vm366 = vcmp.lt.s32.totalorder %v323, 2
        %v367 = vsel %vm366, %v363, %v365
        %v368 = vsel %vm366, %v365, %v363
        %vm369 = vcmp.ge.s32.totalorder %v347, 2
        %vm370 = vcmp.ge.s32.totalorder %v348, 2
        %v371 = vsel %vm369, %v368, 0.0
        %v372 = vsel %vm370, %v367, 0.0
        %s373 = scalar_lea.vmem %s1, 16
        %v374 = vld [vmem:[%s373] sm:$0xff]
        %v375 = vld [vmem:[%s373 + $0x8] sm:$0xff]
        %vm376 = vcmask 64512
        %v378 = vsel %vm376, %v374, 0
        %v381 = vsel %vm376, %v375, 0
        %383 = vmatprep.subr.mxu0 0.0
        %384 = vmatpush1.msra.mxu0 0.0
        %385 = vmatprep.subr.mxu0 0.0
        %386 = vmatpush1.msra.mxu0 0.0
        %387 = vmatprep.subr.mxu0 0.0
        %388 = vmatpush1.msra.mxu0 0.0
        %389 = vmatprep.subr.mxu0 0.0
        %390 = vmatpush1.msra.mxu0 0.0
        %391 = vmatprep.subr.mxu0 0.0
        %392 = vmatpush1.msra.mxu0 0.0
        %393 = vmatprep.subr.mxu0 0.0
        %394 = vmatpush1.msra.mxu0 0.0
        %395 = vmatprep.subr.mxu0 0.0
        %396 = vmatpush1.msra.mxu0 0.0
        %397 = vmatprep.subr.mxu0 0.0
        %398 = vmatpush1.msra.mxu0 0.0
        %399 = vmatprep.subr.mxu0 0.0
        %400 = vmatpush1.msra.mxu0 0.0
        %401 = vmatprep.subr.mxu0 0.0
        %402 = vmatpush1.msra.mxu0 0.0
        %403 = vmatprep.subr.mxu0 0.0
        %404 = vmatpush1.msra.mxu0 0.0
        %405 = vmatprep.subr.mxu0 0.0
        %406 = vmatpush1.msra.mxu0 0.0
        %407 = vmatprep.subr.mxu0 0.0
        %408 = vmatpush1.msra.mxu0 0.0
        %409 = vmatprep.subr.mxu0 0.0
        %410 = vmatpush1.msra.mxu0 0.0
        %411 = vmatprep.subr.mxu0 0.0
        %412 = vmatpush1.msra.mxu0 0.0
        %413 = vmatprep.subr.mxu0 %v372
        %414 = vmatpush1.msra.mxu0 %v371
        %415 = vmatprep.subr.mxu0 0.0
        %416 = vmatpush2.msra.mxu0 0.0
        %417 = vmatprep.subr.mxu0 0.0
        %418 = vmatpush2.msra.mxu0 0.0
        %419 = vmatprep.subr.mxu0 0.0
        %420 = vmatpush2.msra.mxu0 0.0
        %421 = vmatprep.subr.mxu0 0.0
        %422 = vmatpush2.msra.mxu0 0.0
        %423 = vmatprep.subr.mxu0 0.0
        %424 = vmatpush2.msra.mxu0 0.0
        %425 = vmatprep.subr.mxu0 0.0
        %426 = vmatpush2.msra.mxu0 0.0
        %427 = vmatprep.subr.mxu0 0.0
        %428 = vmatpush2.msra.mxu0 0.0
        %429 = vmatprep.subr.mxu0 0.0
        %430 = vmatpush2.msra.mxu0 0.0
        %431 = vmatprep.subr.mxu0 0.0
        %432 = vmatpush2.msra.mxu0 0.0
        %433 = vmatprep.subr.mxu0 0.0
        %434 = vmatpush2.msra.mxu0 0.0
        %435 = vmatprep.subr.mxu0 0.0
        %436 = vmatpush2.msra.mxu0 0.0
        %437 = vmatprep.subr.mxu0 0.0
        %438 = vmatpush2.msra.mxu0 0.0
        %439 = vmatprep.subr.mxu0 0.0
        %440 = vmatpush2.msra.mxu0 0.0
        %441 = vmatprep.subr.mxu0 0.0
        %442 = vmatpush2.msra.mxu0 0.0
        %443 = vmatprep.subr.mxu0 0.0
        %444 = vmatpush2.msra.mxu0 0.0
        %445 = vmatprep.subr.mxu0 0.0
        %446 = vmatpush2.msra.mxu0 0.0
        %447 = vmatprep.mubr.f32.mxu0 0.0
        %448 = vmatmul.mubr.f32.gmra.mxu0 %v378
        %v449 = vpop.f32.mrf.mxu0
        %v450 = vadd.f32 0.0, %v449
        %v451 = vpop.f32.mrf.mxu0
        %v452 = vadd.f32 0.0, %v451
        %453 = vmatprep.mubr.f32.mxu0 0.0
        %454 = vmatmul.mubr.f32.gmra.mxu0 %v381
        %v455 = vpop.f32.mrf.mxu0
        %v456 = vadd.f32 0.0, %v455
        %v457 = vpop.f32.mrf.mxu0
        %v458 = vadd.f32 0.0, %v457
        %459 = vdwg.mxu0
        %v461 = vsel %vm376, %v360, 0
        %v464 = vsel %vm376, %v361, 0
        %466 = vmatprep.subr.mxu0 0.0
        %467 = vmatpush1.msra.mxu0 0.0
        %468 = vmatprep.subr.mxu0 0.0
        %469 = vmatpush1.msra.mxu0 0.0
        %470 = vmatprep.subr.mxu0 0.0
        %471 = vmatpush1.msra.mxu0 0.0
        %472 = vmatprep.subr.mxu0 0.0
        %473 = vmatpush1.msra.mxu0 0.0
        %474 = vmatprep.subr.mxu0 0.0
        %475 = vmatpush1.msra.mxu0 0.0
        %476 = vmatprep.subr.mxu0 0.0
        %477 = vmatpush1.msra.mxu0 0.0
        %478 = vmatprep.subr.mxu0 0.0
        %479 = vmatpush1.msra.mxu0 0.0
        %480 = vmatprep.subr.mxu0 0.0
        %481 = vmatpush1.msra.mxu0 0.0
        %482 = vmatprep.subr.mxu0 0.0
        %483 = vmatpush1.msra.mxu0 0.0
        %484 = vmatprep.subr.mxu0 0.0
        %485 = vmatpush1.msra.mxu0 0.0
        %486 = vmatprep.subr.mxu0 0.0
        %487 = vmatpush1.msra.mxu0 0.0
        %488 = vmatprep.subr.mxu0 0.0
        %489 = vmatpush1.msra.mxu0 0.0
        %490 = vmatprep.subr.mxu0 0.0
        %491 = vmatpush1.msra.mxu0 0.0
        %492 = vmatprep.subr.mxu0 0.0
        %493 = vmatpush1.msra.mxu0 0.0
        %494 = vmatprep.subr.mxu0 0.0
        %495 = vmatpush1.msra.mxu0 0.0
        %496 = vmatprep.subr.mxu0 %v359
        %497 = vmatpush1.msra.mxu0 %v358
        %498 = vmatprep.subr.mxu0 0.0
        %499 = vmatpush2.msra.mxu0 0.0
        %500 = vmatprep.subr.mxu0 0.0
        %501 = vmatpush2.msra.mxu0 0.0
        %502 = vmatprep.subr.mxu0 0.0
        %503 = vmatpush2.msra.mxu0 0.0
        %504 = vmatprep.subr.mxu0 0.0
        %505 = vmatpush2.msra.mxu0 0.0
        %506 = vmatprep.subr.mxu0 0.0
        %507 = vmatpush2.msra.mxu0 0.0
        %508 = vmatprep.subr.mxu0 0.0
        %509 = vmatpush2.msra.mxu0 0.0
        %510 = vmatprep.subr.mxu0 0.0
        %511 = vmatpush2.msra.mxu0 0.0
        %512 = vmatprep.subr.mxu0 0.0
        %513 = vmatpush2.msra.mxu0 0.0
        %514 = vmatprep.subr.mxu0 0.0
        %515 = vmatpush2.msra.mxu0 0.0
        %516 = vmatprep.subr.mxu0 0.0
        %517 = vmatpush2.msra.mxu0 0.0
        %518 = vmatprep.subr.mxu0 0.0
        %519 = vmatpush2.msra.mxu0 0.0
        %520 = vmatprep.subr.mxu0 0.0
        %521 = vmatpush2.msra.mxu0 0.0
        %522 = vmatprep.subr.mxu0 0.0
        %523 = vmatpush2.msra.mxu0 0.0
        %524 = vmatprep.subr.mxu0 0.0
        %525 = vmatpush2.msra.mxu0 0.0
        %526 = vmatprep.subr.mxu0 0.0
        %527 = vmatpush2.msra.mxu0 0.0
        %528 = vmatprep.subr.mxu0 0.0
        %529 = vmatpush2.msra.mxu0 0.0
        %530 = vmatprep.mubr.f32.mxu0 0.0
        %531 = vmatmul.mubr.f32.gmra.mxu0 %v461
        %v532 = vpop.f32.mrf.mxu0
        %v533 = vadd.f32 %v450, %v532
        %v534 = vpop.f32.mrf.mxu0
        %v535 = vadd.f32 %v452, %v534
        %536 = vmatprep.mubr.f32.mxu0 0.0
        %537 = vmatmul.mubr.f32.gmra.mxu0 %v464
        %v538 = vpop.f32.mrf.mxu0
        %v539 = vadd.f32 %v456, %v538
        %v540 = vpop.f32.mrf.mxu0
        %v541 = vadd.f32 %v458, %v540
        %542 = vdwg.mxu0
        %s543 = scalar_lea.vmem %s1, 32
        %v544 = vld [vmem:[%s543] sm:$0xff]
        %v545 = vld [vmem:[%s543 + $0x8] sm:$0xff]
        %v547 = vsel %vm376, %v544, 0
        %v550 = vsel %vm376, %v545, 0
        %552 = vmatprep.subr.mxu0 0.0
        %553 = vmatpush1.msra.mxu0 0.0
        %554 = vmatprep.subr.mxu0 0.0
        %555 = vmatpush1.msra.mxu0 0.0
        %556 = vmatprep.subr.mxu0 0.0
        %557 = vmatpush1.msra.mxu0 0.0
        %558 = vmatprep.subr.mxu0 0.0
        %559 = vmatpush1.msra.mxu0 0.0
        %560 = vmatprep.subr.mxu0 0.0
        %561 = vmatpush1.msra.mxu0 0.0
        %562 = vmatprep.subr.mxu0 0.0
        %563 = vmatpush1.msra.mxu0 0.0
        %564 = vmatprep.subr.mxu0 0.0
        %565 = vmatpush1.msra.mxu0 0.0
        %566 = vmatprep.subr.mxu0 0.0
        %567 = vmatpush1.msra.mxu0 0.0
        %568 = vmatprep.subr.mxu0 0.0
        %569 = vmatpush1.msra.mxu0 0.0
        %570 = vmatprep.subr.mxu0 0.0
        %571 = vmatpush1.msra.mxu0 0.0
        %572 = vmatprep.subr.mxu0 0.0
        %573 = vmatpush1.msra.mxu0 0.0
        %574 = vmatprep.subr.mxu0 0.0
        %575 = vmatpush1.msra.mxu0 0.0
        %576 = vmatprep.subr.mxu0 0.0
        %577 = vmatpush1.msra.mxu0 0.0
        %578 = vmatprep.subr.mxu0 0.0
        %579 = vmatpush1.msra.mxu0 0.0
        %580 = vmatprep.subr.mxu0 0.0
        %581 = vmatpush1.msra.mxu0 0.0
        %582 = vmatprep.subr.mxu0 %v321
        %583 = vmatpush1.msra.mxu0 %v319
        %584 = vmatprep.subr.mxu0 0.0
        %585 = vmatpush2.msra.mxu0 0.0
        %586 = vmatprep.subr.mxu0 0.0
        %587 = vmatpush2.msra.mxu0 0.0
        %588 = vmatprep.subr.mxu0 0.0
        %589 = vmatpush2.msra.mxu0 0.0
        %590 = vmatprep.subr.mxu0 0.0
        %591 = vmatpush2.msra.mxu0 0.0
        %592 = vmatprep.subr.mxu0 0.0
        %593 = vmatpush2.msra.mxu0 0.0
        %594 = vmatprep.subr.mxu0 0.0
        %595 = vmatpush2.msra.mxu0 0.0
        %596 = vmatprep.subr.mxu0 0.0
        %597 = vmatpush2.msra.mxu0 0.0
        %598 = vmatprep.subr.mxu0 0.0
        %599 = vmatpush2.msra.mxu0 0.0
        %600 = vmatprep.subr.mxu0 0.0
        %601 = vmatpush2.msra.mxu0 0.0
        %602 = vmatprep.subr.mxu0 0.0
        %603 = vmatpush2.msra.mxu0 0.0
        %604 = vmatprep.subr.mxu0 0.0
        %605 = vmatpush2.msra.mxu0 0.0
        %606 = vmatprep.subr.mxu0 0.0
        %607 = vmatpush2.msra.mxu0 0.0
        %608 = vmatprep.subr.mxu0 0.0
        %609 = vmatpush2.msra.mxu0 0.0
        %610 = vmatprep.subr.mxu0 0.0
        %611 = vmatpush2.msra.mxu0 0.0
        %612 = vmatprep.subr.mxu0 0.0
        %613 = vmatpush2.msra.mxu0 0.0
        %614 = vmatprep.subr.mxu0 0.0
        %615 = vmatpush2.msra.mxu0 0.0
        %616 = vmatprep.mubr.f32.mxu0 0.0
        %617 = vmatmul.mubr.f32.gmra.mxu0 %v547
        %v618 = vpop.f32.mrf.mxu0
        %v619 = vadd.f32 0.0, %v618
        %v620 = vpop.f32.mrf.mxu0
        %v621 = vadd.f32 0.0, %v620
        %622 = vmatprep.mubr.f32.mxu0 0.0
        %623 = vmatmul.mubr.f32.gmra.mxu0 %v550
        %v624 = vpop.f32.mrf.mxu0
        %v625 = vadd.f32 0.0, %v624
        %v626 = vpop.f32.mrf.mxu0
        %v627 = vadd.f32 0.0, %v626
        %628 = vdwg.mxu0
        %v629 = vadd.f32 %v533, %v619
        %v630 = vadd.f32 %v535, %v621
        %v631 = vadd.f32 %v539, %v625
        %v632 = vadd.f32 %v541, %v627
        %v633 = vld [vmem:[%s2] sm:$0xff]
        %v634 = vld [vmem:[%s2 + $0x8] sm:$0xff]
        %636 = vset.pattern.permute.xlu0 0
        %637 = vperm.xlu0 %636, %v633
        %v638 = vpop.permute.xlu0 %637
        %641 = vset.pattern.permute.xlu0 0
        %642 = vperm.xlu0 %641, %v634
        %v643 = vpop.permute.xlu0 %642
        %v645 = vadd.f32 %v629, %v638
        %v646 = vadd.f32 %v630, %v638
        %v647 = vadd.f32 %v631, %v643
        %v648 = vadd.f32 %v632, %v643
        %v649 = vtanh.pop %v645
        %v650 = vtanh.pop %v646
        %v651 = vmul.f32 %v647, 0.5
        %v652 = vmul.f32 %v648, 0.5
        %v653 = vtanh.pop %v651
        %v654 = vtanh.pop %v652
        %v655 = vmul.f32 %v653, 0.5
        %v656 = vmul.f32 %v654, 0.5
        %v657 = vadd.f32 %v655, 0.5
        %v658 = vadd.f32 %v656, 0.5
        %v659 = vmul.f32 %v649, %v657
        %v660 = vmul.f32 %v650, %v658
        %v661 = vld [vmem:[%s3] sm:$0xff]
        %v662 = vld [vmem:[%s4] sm:$0xff]
        %664 = vset.pattern.permute.xlu0 0
        %665 = vperm.xlu0 %664, %v662
        %v666 = vpop.permute.xlu0 %665
        %v669 = vsel %vm376, %v661, 0
        %671 = vmatprep.subr.mxu0 0.0
        %672 = vmatpush1.msra.mxu0 0.0
        %673 = vmatprep.subr.mxu0 0.0
        %674 = vmatpush1.msra.mxu0 0.0
        %675 = vmatprep.subr.mxu0 0.0
        %676 = vmatpush1.msra.mxu0 0.0
        %677 = vmatprep.subr.mxu0 0.0
        %678 = vmatpush1.msra.mxu0 0.0
        %679 = vmatprep.subr.mxu0 0.0
        %680 = vmatpush1.msra.mxu0 0.0
        %681 = vmatprep.subr.mxu0 0.0
        %682 = vmatpush1.msra.mxu0 0.0
        %683 = vmatprep.subr.mxu0 0.0
        %684 = vmatpush1.msra.mxu0 0.0
        %685 = vmatprep.subr.mxu0 0.0
        %686 = vmatpush1.msra.mxu0 0.0
        %687 = vmatprep.subr.mxu0 0.0
        %688 = vmatpush1.msra.mxu0 0.0
        %689 = vmatprep.subr.mxu0 0.0
        %690 = vmatpush1.msra.mxu0 0.0
        %691 = vmatprep.subr.mxu0 0.0
        %692 = vmatpush1.msra.mxu0 0.0
        %693 = vmatprep.subr.mxu0 0.0
        %694 = vmatpush1.msra.mxu0 0.0
        %695 = vmatprep.subr.mxu0 0.0
        %696 = vmatpush1.msra.mxu0 0.0
        %697 = vmatprep.subr.mxu0 0.0
        %698 = vmatpush1.msra.mxu0 0.0
        %699 = vmatprep.subr.mxu0 0.0
        %700 = vmatpush1.msra.mxu0 0.0
        %701 = vmatprep.subr.mxu0 %v660
        %702 = vmatpush1.msra.mxu0 %v659
        %703 = vmatprep.subr.mxu0 0.0
        %704 = vmatpush2.msra.mxu0 0.0
        %705 = vmatprep.subr.mxu0 0.0
        %706 = vmatpush2.msra.mxu0 0.0
        %707 = vmatprep.subr.mxu0 0.0
        %708 = vmatpush2.msra.mxu0 0.0
        %709 = vmatprep.subr.mxu0 0.0
        %710 = vmatpush2.msra.mxu0 0.0
        %711 = vmatprep.subr.mxu0 0.0
        %712 = vmatpush2.msra.mxu0 0.0
        %713 = vmatprep.subr.mxu0 0.0
        %714 = vmatpush2.msra.mxu0 0.0
        %715 = vmatprep.subr.mxu0 0.0
        %716 = vmatpush2.msra.mxu0 0.0
        %717 = vmatprep.subr.mxu0 0.0
        %718 = vmatpush2.msra.mxu0 0.0
        %719 = vmatprep.subr.mxu0 0.0
        %720 = vmatpush2.msra.mxu0 0.0
        %721 = vmatprep.subr.mxu0 0.0
        %722 = vmatpush2.msra.mxu0 0.0
        %723 = vmatprep.subr.mxu0 0.0
        %724 = vmatpush2.msra.mxu0 0.0
        %725 = vmatprep.subr.mxu0 0.0
        %726 = vmatpush2.msra.mxu0 0.0
        %727 = vmatprep.subr.mxu0 0.0
        %728 = vmatpush2.msra.mxu0 0.0
        %729 = vmatprep.subr.mxu0 0.0
        %730 = vmatpush2.msra.mxu0 0.0
        %731 = vmatprep.subr.mxu0 0.0
        %732 = vmatpush2.msra.mxu0 0.0
        %733 = vmatprep.subr.mxu0 0.0
        %734 = vmatpush2.msra.mxu0 0.0
        %735 = vmatprep.mubr.f32.mxu0 0.0
        %736 = vmatmul.mubr.f32.gmra.mxu0 %v669
        %v737 = vpop.f32.mrf.mxu0
        %v738 = vadd.f32 %v666, %v737
        %v739 = vpop.f32.mrf.mxu0
        %v740 = vadd.f32 %v666, %v739
        %741 = vdwg.mxu0
        %v742 = vld [vmem:[%s5] sm:$0xff]
        %v743 = vld [vmem:[%s6] sm:$0xff]
        %745 = vset.pattern.permute.xlu0 0
        %746 = vperm.xlu0 %745, %v743
        %v747 = vpop.permute.xlu0 %746
        %v750 = vsel %vm376, %v742, 0
        %752 = vmatprep.subr.mxu0 0.0
        %753 = vmatpush1.msra.mxu0 0.0
        %754 = vmatprep.subr.mxu0 0.0
        %755 = vmatpush1.msra.mxu0 0.0
        %756 = vmatprep.subr.mxu0 0.0
        %757 = vmatpush1.msra.mxu0 0.0
        %758 = vmatprep.subr.mxu0 0.0
        %759 = vmatpush1.msra.mxu0 0.0
        %760 = vmatprep.subr.mxu0 0.0
        %761 = vmatpush1.msra.mxu0 0.0
        %762 = vmatprep.subr.mxu0 0.0
        %763 = vmatpush1.msra.mxu0 0.0
        %764 = vmatprep.subr.mxu0 0.0
        %765 = vmatpush1.msra.mxu0 0.0
        %766 = vmatprep.subr.mxu0 0.0
        %767 = vmatpush1.msra.mxu0 0.0
        %768 = vmatprep.subr.mxu0 0.0
        %769 = vmatpush1.msra.mxu0 0.0
        %770 = vmatprep.subr.mxu0 0.0
        %771 = vmatpush1.msra.mxu0 0.0
        %772 = vmatprep.subr.mxu0 0.0
        %773 = vmatpush1.msra.mxu0 0.0
        %774 = vmatprep.subr.mxu0 0.0
        %775 = vmatpush1.msra.mxu0 0.0
        %776 = vmatprep.subr.mxu0 0.0
        %777 = vmatpush1.msra.mxu0 0.0
        %778 = vmatprep.subr.mxu0 0.0
        %779 = vmatpush1.msra.mxu0 0.0
        %780 = vmatprep.subr.mxu0 0.0
        %781 = vmatpush1.msra.mxu0 0.0
        %782 = vmatprep.subr.mxu0 %v740
        %783 = vmatpush1.msra.mxu0 %v738
        %784 = vmatprep.subr.mxu0 0.0
        %785 = vmatpush2.msra.mxu0 0.0
        %786 = vmatprep.subr.mxu0 0.0
        %787 = vmatpush2.msra.mxu0 0.0
        %788 = vmatprep.subr.mxu0 0.0
        %789 = vmatpush2.msra.mxu0 0.0
        %790 = vmatprep.subr.mxu0 0.0
        %791 = vmatpush2.msra.mxu0 0.0
        %792 = vmatprep.subr.mxu0 0.0
        %793 = vmatpush2.msra.mxu0 0.0
        %794 = vmatprep.subr.mxu0 0.0
        %795 = vmatpush2.msra.mxu0 0.0
        %796 = vmatprep.subr.mxu0 0.0
        %797 = vmatpush2.msra.mxu0 0.0
        %798 = vmatprep.subr.mxu0 0.0
        %799 = vmatpush2.msra.mxu0 0.0
        %800 = vmatprep.subr.mxu0 0.0
        %801 = vmatpush2.msra.mxu0 0.0
        %802 = vmatprep.subr.mxu0 0.0
        %803 = vmatpush2.msra.mxu0 0.0
        %804 = vmatprep.subr.mxu0 0.0
        %805 = vmatpush2.msra.mxu0 0.0
        %806 = vmatprep.subr.mxu0 0.0
        %807 = vmatpush2.msra.mxu0 0.0
        %808 = vmatprep.subr.mxu0 0.0
        %809 = vmatpush2.msra.mxu0 0.0
        %810 = vmatprep.subr.mxu0 0.0
        %811 = vmatpush2.msra.mxu0 0.0
        %812 = vmatprep.subr.mxu0 0.0
        %813 = vmatpush2.msra.mxu0 0.0
        %814 = vmatprep.subr.mxu0 0.0
        %815 = vmatpush2.msra.mxu0 0.0
        %816 = vmatprep.mubr.f32.mxu0 0.0
        %817 = vmatmul.mubr.f32.gmra.mxu0 %v750
        %v818 = vpop.f32.mrf.mxu0
        %v819 = vadd.f32 %v747, %v818
        %v820 = vpop.f32.mrf.mxu0
        %v821 = vadd.f32 %v747, %v820
        %822 = vdwg.mxu0
        %v823 = vadd.f32 %v738, %v319
        %v824 = vadd.f32 %v740, %v321
        %825 = vst [vmem:[%s303] sm:$0xff] %v819
        %826 = vst [vmem:[%s310] sm:$0xff] %v823
        %s827 = scalar_lea.vmem %s303, 8 [#allocation2]
        %828 = vst [vmem:[%s827] sm:$0xff] %v821
        %s829 = scalar_lea.vmem %s310, 8 [#allocation4]
        %830 = vst [vmem:[%s829] sm:$0xff] %v824
        %s831 = sand.u32 %s186, 1
        %s832 = scalar_lea.sflag [#allocation3], %s831
        %s833 = sand.u32 %s186, 1
        %s834 = smul.addr %s833, 16
        %s835 = scalar_lea.vmem [#allocation2], %s834
        %s836 = sand.u32 %s212, 1
        %s837 = scalar_lea.sflag [#allocation5], %s836
        %s838 = sand.u32 %s212, 1
        %s839 = smul.addr %s838, 16
        %s840 = scalar_lea.vmem [#allocation4], %s839
        // Predicated region
        $region49: #{residual_layer_forward.1} parent=47 // pred_check
          %p841 = pneg %p196
        $region50: #{residual_layer_forward.1} parent=47 // pred_check_branch
          %843 = sbr.rel (%p841) target = $region52
        $region51: #{residual_layer_forward.1} parent=47 // pred_region
          %s844 = smul.u32 2, %s26
          %s846 = ssub.s32 256, 256
          %847 = vsyncadd %s832, %s846
          %s848 = smul.addr %s844, 128
          %s849 = scalar_lea.hbm %s7, %s848
          %s850 = sshll.u32 %s835, 4
          %s851 = int_to_ptr.vmem [resolvable:$true] %s850
          %856 = dma.vmem_to_hbm [thread:$0]  %s851, 256, %s849, %s832, 128, 128, 8
        $region52: #{residual_layer_forward.1} parent=47 // pred_fallthru
          _
        // Predicated region
        $region53: #{residual_layer_forward.1} parent=47 // pred_check
          %p857 = pneg %p222
        $region54: #{residual_layer_forward.1} parent=47 // pred_check_branch
          %859 = sbr.rel (%p857) target = $region56
        $region55: #{residual_layer_forward.1} parent=47 // pred_region
          %s860 = smul.u32 2, %s26
          %s862 = ssub.s32 256, 256
          %863 = vsyncadd %s837, %s862
          %s864 = smul.addr %s860, 128
          %s865 = scalar_lea.hbm %s8, %s864
          %s866 = sshll.u32 %s840, 4
          %s867 = int_to_ptr.vmem [resolvable:$true] %s866
          %872 = dma.vmem_to_hbm [thread:$0]  %s867, 256, %s865, %s837, 128, 128, 8
        $region56: #{residual_layer_forward.1} parent=47 // pred_fallthru
          _
      $region48: #{residual_layer_forward.1} parent=5 // pred_fallthru
        _
      %p873 = scmp.le.s32.totalorder 2, %s21
      // Predicated region
      $region57: #{residual_layer_forward.1} parent=5 // pred_check
        %p874 = pneg %p873
      $region58: #{residual_layer_forward.1} parent=5 // pred_check_branch
        %876 = sbr.rel (%p874) target = $region60
      $region59: #{residual_layer_forward.1} parent=5 // pred_region
        %s877 = ssub.s32 %s21, 2
        // Predicated region
        $region61: #{residual_layer_forward.1} parent=59 // pred_check
          %p878 = pneg %p202
        $region62: #{residual_layer_forward.1} parent=59 // pred_check_branch
          %880 = sbr.rel (%p878) target = $region64
        $region63: #{residual_layer_forward.1} parent=59 // pred_region
          %s881 = sand.u32 %s187, 1
          %s882 = scalar_lea.sflag [#allocation3], %s881
          %s883 = sand.u32 %s187, 1
          %s884 = smul.addr %s883, 16
          %s885 = scalar_lea.vmem [#allocation2], %s884
          %886 = dma.done %s882, 256
        $region64: #{residual_layer_forward.1} parent=59 // pred_fallthru
          _
        // Predicated region
        $region65: #{residual_layer_forward.1} parent=59 // pred_check
          %p887 = pneg %p228
        $region66: #{residual_layer_forward.1} parent=59 // pred_check_branch
          %889 = sbr.rel (%p887) target = $region68
        $region67: #{residual_layer_forward.1} parent=59 // pred_region
          %s890 = sand.u32 %s213, 1
          %s891 = scalar_lea.sflag [#allocation5], %s890
          %s892 = sand.u32 %s213, 1
          %s893 = smul.addr %s892, 16
          %s894 = scalar_lea.vmem [#allocation4], %s893
          %895 = dma.done %s891, 256
        $region68: #{residual_layer_forward.1} parent=59 // pred_fallthru
          _
      $region60: #{residual_layer_forward.1} parent=5 // pred_fallthru
        _
    $region6: #{residual_layer_forward.1} parent=1 // loop_footer
      %s25 = sadd.s32 1, %s21
    $region7: #{residual_layer_forward.1} parent=1 // loop_footer_branch
      %20 = sbr.rel target = $region3
    $region8: #{residual_layer_forward.1} parent=1 // loop_exit
      _
    %896 = vsyncpa [#allocation3], 1
    %s897 = scalar_lea.sflag [#allocation3], 1
    %898 = vsyncpa %s897, 1
    %899 = vsyncpa [#allocation5], 1
    %s900 = scalar_lea.sflag [#allocation5], 1
    %901 = vsyncpa %s900, 1

</llo_original>
